<compile_context>
chip_gen: v7x
topology: tpu7x:2x2x1
jax: 0.10.0
libtpu: 0.0.40
codegen_flags: <defaults>
</compile_context>

<pallas_src>
import functools

import jax
import jax.numpy as jnp
import numpy as np
from jax.experimental import pallas as pl
from jax.experimental.pallas import tpu as pltpu

C_IN = 6    # Corrector default `channels`
C_OUT = 3   # unet output is viewed as 3 channels
K = 3       # conv kernel size of the stand-in unet
CENTER = (K // 2) * K + (K // 2)   # index of the (1,1) tap = 4


def corrector_kernel(x_ref, w_ref, b_ref, m_ref, o_ref, col_ref, *, img_w):
    # x_ref  : (TB, C_IN, HW)      input images, native dtype, lane-dense
    # w_ref  : (C_OUT, K*K*C_IN)   im2col-packed conv weights
    # b_ref  : (C_OUT, 1)          conv bias
    # m_ref  : (K*K, HW)           0/1 boundary masks per tap (precomputed)
    # o_ref  : (TB, C_OUT, HW)     output block
    # col_ref: (TB, K*K*C_IN, HW)  f32 im2col scratch (fully rewritten per step)
    tb, _, hw = x_ref.shape

    x = x_ref[...].astype(jnp.float32)                    # (TB, C_IN, HW)

    # im2col via lane rolls: tap (kh,kw) needs x[c, y+kh-1, x+kw-1], which in
    # the flat HW layout is a lane shift by s = (kh-1)*W + (kw-1).  Wrapped /
    # out-of-image lanes are exactly the mask==0 lanes, so multiplying by the
    # precomputed 0/1 mask reproduces the zero padding of the conv.
    for kh in range(K):
        for kw in range(K):
            t = kh * K + kw
            s = (kh - 1) * img_w + (kw - 1)
            if s == 0:
                vals = x                                   # centre tap: identity
            else:
                shifted = pltpu.roll(x, (-s) % hw, axis=2)
                vals = shifted * m_ref[t:t + 1, :]         # (1,HW) broadcast
            col_ref[:, t * C_IN:(t + 1) * C_IN, :] = vals

    wv = w_ref[...]                                        # (C_OUT, 54)
    bv = b_ref[...]                                        # (C_OUT, 1)

    @pl.loop(0, tb)
    def _(i):
        ci = col_ref[i]                                    # (54, HW), f32
        acc = jnp.dot(wv, ci, preferred_element_type=jnp.float32)   # (C_OUT, HW)
        # Residual: torch.split(x_orig, 3, dim=-3)[0] == first 3 input channels,
        # which are exactly the (unmasked) centre-tap rows of the col slab.
        acc = acc + bv + ci[CENTER * C_IN:CENTER * C_IN + C_OUT, :]
        o_ref[i] = acc.astype(o_ref.dtype)


def _tap_masks(h, w):
    """(K*K, H*W) float32 0/1 masks: tap (kh,kw) valid iff the shifted source
    pixel lies inside the image (i.e. the conv's zero-padding region -> 0)."""
    yy, xx = np.meshgrid(np.arange(h), np.arange(w), indexing="ij")
    yy = yy.reshape(-1)
    xx = xx.reshape(-1)
    m = np.zeros((K * K, h * w), np.float32)
    for kh in range(K):
        for kw in range(K):
            dy, dx = kh - 1, kw - 1
            valid = ((yy + dy >= 0) & (yy + dy < h) &
                     (xx + dx >= 0) & (xx + dx < w))
            m[kh * K + kw] = valid.astype(np.float32)
    return jnp.asarray(m)


def _pick_tb(n, hw, itemsize):
    """Images per grid step: fill a ~20 MiB VMEM buffer budget (under an
    explicit 48 MiB limit); give multi-TC chips >=2 even grid steps when there
    is enough work."""
    pad8 = lambda r: -(-r // 8) * 8
    per_img = (2 * pad8(C_IN) * hw * itemsize          # input double buffer
               + 2 * pad8(C_OUT) * hw * itemsize       # output double buffer
               + pad8(K * K * C_IN) * hw * 4           # col scratch
               + 2 * pad8(C_IN) * hw * 4)              # slack: f32 copy + tap temp
    budget = 20 << 20
    tb = max(1, min(n, budget // per_img))
    steps = pl.cdiv(n, tb)
    if steps == 1 and n >= 16:
        steps = 2                                      # let a 2nd TensorCore help
    if steps > 1 and steps % 2:
        steps += 1                                     # even split across 2 TCs
    return max(1, pl.cdiv(n, steps))


def corrector_forward(x_orig, w, b):
    """x_orig: (B, T, C_IN, H, W); w: (C_OUT, C_IN, K, K); b: (C_OUT,)."""
    B, T, C, H, W = x_orig.shape
    assert C == C_IN
    N = B * T
    HW = H * W

    # Free, contiguous reshape — no pad, no upcast, no transpose in the wrapper.
    x_flat = x_orig.reshape(N, C_IN, HW)

    # im2col-packed weights: w_mat[o, (kh*K + kw)*C_IN + c] = w[o, c, kh, kw].
    w_mat = jnp.transpose(w, (0, 2, 3, 1)).reshape(C_OUT, K * K * C_IN)
    w_mat = w_mat.astype(jnp.float32)
    b2 = b.reshape(C_OUT, 1).astype(jnp.float32)
    masks = _tap_masks(H, W)                              # (9, HW), tiny constant

    TB = _pick_tb(N, HW, x_flat.dtype.itemsize)
    grid = (pl.cdiv(N, TB),)

    kern = functools.partial(corrector_kernel, img_w=W)

    out = pl.pallas_call(
        kern,
        out_shape=jax.ShapeDtypeStruct((N, C_OUT, HW), x_orig.dtype),
        grid_spec=pltpu.PrefetchScalarGridSpec(
            num_scalar_prefetch=0,
            grid=grid,
            in_specs=[
                pl.BlockSpec((TB, C_IN, HW), lambda i: (i, 0, 0)),
                pl.BlockSpec((C_OUT, K * K * C_IN), lambda i: (0, 0)),
                pl.BlockSpec((C_OUT, 1), lambda i: (0, 0)),
                pl.BlockSpec((K * K, HW), lambda i: (0, 0)),
            ],
            out_specs=pl.BlockSpec((TB, C_OUT, HW), lambda i: (i, 0, 0)),
            scratch_shapes=[pltpu.VMEM((TB, K * K * C_IN, HW), jnp.float32)],
        ),
        compiler_params=pltpu.CompilerParams(
            dimension_semantics=("parallel",),
            vmem_limit_bytes=48 << 20),
    )(x_flat, w_mat, b2, masks)
    return out.reshape(B, T, C_OUT, H, W)


def corrector_reference(x_orig, w, b):
    """Pure-JAX reference with identical math (tap-loop conv + residual)."""
    B, T, C, H, W = x_orig.shape
    x = x_orig.reshape(B * T, C, H, W).astype(jnp.float32)
    xpad = jnp.pad(x, ((0, 0), (0, 0), (1, 1), (1, 1)))
    out = jnp.zeros((B * T, C_OUT, H, W), jnp.float32) + b.reshape(1, C_OUT, 1, 1)
    for kh in range(K):
        for kw in range(K):
            xs = xpad[:, :, kh:kh + H, kw:kw + W]
            out = out + jnp.einsum('oc,nchw->nohw',
                                   w[:, :, kh, kw].astype(jnp.float32), xs)
    out = out + x[:, :C_OUT]
    return out.reshape(B, T, C_OUT, H, W)


if __name__ == "__main__":
    key = jax.random.PRNGKey(0)
    kx, kw_key, kb = jax.random.split(key, 3)

    B, T, H, W = 2, 2, 16, 16
    x_orig = jax.random.normal(kx, (B, T, C_IN, H, W), dtype=jnp.float32)

    # Deterministic synthetic unet (single 3x3 conv) parameters.
    w = 0.1 * jax.random.normal(kw_key, (C_OUT, C_IN, K, K), dtype=jnp.float32)
    b = 0.1 * jax.random.normal(kb, (C_OUT,), dtype=jnp.float32)

    out = jax.block_until_ready(corrector_forward(x_orig, w, b))

    ref = corrector_reference(x_orig, w, b)
    assert out.shape == (B, T, C_OUT, H, W)
    assert jnp.allclose(out, ref, rtol=1e-3, atol=1e-3)

    print("KERNEL_OK")
</pallas_src>

<mosaic_0001>
module attributes {stable_mosaic.version = 11 : i64} {
  func.func @corrector_kernel(%arg0: i32, %arg1: memref<4x6x256xf32, #tpu.memory_space<vmem>>, %arg2: memref<3x54xf32, #tpu.memory_space<vmem>>, %arg3: memref<3x1xf32, #tpu.memory_space<vmem>>, %arg4: memref<9x256xf32, #tpu.memory_space<vmem>>, %arg5: memref<4x3x256xf32, #tpu.memory_space<vmem>>, %arg6: memref<4x54x256xf32, #tpu.memory_space<vmem>>) attributes {dimension_semantics = [#tpu.dimension_semantics<parallel>], iteration_bounds = array<i64: 1>, scalar_prefetch = 0 : i64, scratch_operands = 1 : i64, tpu.core_type = #tpu.core_type<tc>, window_params = [{transform_indices = @transform_0, window_bounds = array<i64: 4, 6, 256>}, {pipeline_mode = #tpu.pipeline_mode<synchronous>, transform_indices = @transform_1, window_bounds = array<i64: 3, 54>}, {pipeline_mode = #tpu.pipeline_mode<synchronous>, transform_indices = @transform_2, window_bounds = array<i64: 3, 1>}, {pipeline_mode = #tpu.pipeline_mode<synchronous>, transform_indices = @transform_3, window_bounds = array<i64: 9, 256>}, {transform_indices = @transform_4, window_bounds = array<i64: 4, 3, 256>}]} {
    %c0 = arith.constant 0 : index
    %c0_0 = arith.constant 0 : index
    %c0_1 = arith.constant 0 : index
    %0 = vector.load %arg1[%c0, %c0_0, %c0_1] : memref<4x6x256xf32, #tpu.memory_space<vmem>>, vector<4x6x256xf32>
    %c17_i32 = arith.constant 17 : i32
    %1 = tpu.dynamic_rotate %0 by %c17_i32 dim 2 : vector<4x6x256xf32>, i32 -> vector<4x6x256xf32>
    %c0_2 = arith.constant 0 : index
    %c0_3 = arith.constant 0 : index
    %2 = vector.load %arg4[%c0_2, %c0_3] : memref<9x256xf32, #tpu.memory_space<vmem>>, vector<1x256xf32>
    %3 = vector.shape_cast %2 : vector<1x256xf32> to vector<1x1x256xf32>
    %4 = vector.broadcast %3 : vector<1x1x256xf32> to vector<4x6x256xf32>
    %5 = arith.mulf %1, %4 : vector<4x6x256xf32>
    %c0_4 = arith.constant 0 : index
    %c0_5 = arith.constant 0 : index
    %c0_6 = arith.constant 0 : index
    %6 = vector.load %arg6[%c0_4, %c0_5, %c0_6] : memref<4x54x256xf32, #tpu.memory_space<vmem>>, vector<4x6x256xf32>
    tpu.vector_store %arg6[%c0_4, %c0_5, %c0_6], %5 {strides = array<i32>} : memref<4x54x256xf32, #tpu.memory_space<vmem>>, vector<4x6x256xf32>,
    %c16_i32 = arith.constant 16 : i32
    %7 = tpu.dynamic_rotate %0 by %c16_i32 dim 2 : vector<4x6x256xf32>, i32 -> vector<4x6x256xf32>
    %c1 = arith.constant 1 : index
    %c0_7 = arith.constant 0 : index
    %8 = vector.load %arg4[%c1, %c0_7] : memref<9x256xf32, #tpu.memory_space<vmem>>, vector<1x256xf32>
    %9 = vector.shape_cast %8 : vector<1x256xf32> to vector<1x1x256xf32>
    %10 = vector.broadcast %9 : vector<1x1x256xf32> to vector<4x6x256xf32>
    %11 = arith.mulf %7, %10 : vector<4x6x256xf32>
    %c0_8 = arith.constant 0 : index
    %c6 = arith.constant 6 : index
    %c0_9 = arith.constant 0 : index
    %12 = vector.load %arg6[%c0_8, %c6, %c0_9] : memref<4x54x256xf32, #tpu.memory_space<vmem>>, vector<4x6x256xf32>
    tpu.vector_store %arg6[%c0_8, %c6, %c0_9], %11 {strides = array<i32>} : memref<4x54x256xf32, #tpu.memory_space<vmem>>, vector<4x6x256xf32>,
    %c15_i32 = arith.constant 15 : i32
    %13 = tpu.dynamic_rotate %0 by %c15_i32 dim 2 : vector<4x6x256xf32>, i32 -> vector<4x6x256xf32>
    %c2 = arith.constant 2 : index
    %c0_10 = arith.constant 0 : index
    %14 = vector.load %arg4[%c2, %c0_10] : memref<9x256xf32, #tpu.memory_space<vmem>>, vector<1x256xf32>
    %15 = vector.shape_cast %14 : vector<1x256xf32> to vector<1x1x256xf32>
    %16 = vector.broadcast %15 : vector<1x1x256xf32> to vector<4x6x256xf32>
    %17 = arith.mulf %13, %16 : vector<4x6x256xf32>
    %c0_11 = arith.constant 0 : index
    %c12 = arith.constant 12 : index
    %c0_12 = arith.constant 0 : index
    %18 = vector.load %arg6[%c0_11, %c12, %c0_12] : memref<4x54x256xf32, #tpu.memory_space<vmem>>, vector<4x6x256xf32>
    tpu.vector_store %arg6[%c0_11, %c12, %c0_12], %17 {strides = array<i32>} : memref<4x54x256xf32, #tpu.memory_space<vmem>>, vector<4x6x256xf32>,
    %c1_i32 = arith.constant 1 : i32
    %19 = tpu.dynamic_rotate %0 by %c1_i32 dim 2 : vector<4x6x256xf32>, i32 -> vector<4x6x256xf32>
    %c3 = arith.constant 3 : index
    %c0_13 = arith.constant 0 : index
    %20 = vector.load %arg4[%c3, %c0_13] : memref<9x256xf32, #tpu.memory_space<vmem>>, vector<1x256xf32>
    %21 = vector.shape_cast %20 : vector<1x256xf32> to vector<1x1x256xf32>
    %22 = vector.broadcast %21 : vector<1x1x256xf32> to vector<4x6x256xf32>
    %23 = arith.mulf %19, %22 : vector<4x6x256xf32>
    %c0_14 = arith.constant 0 : index
    %c18 = arith.constant 18 : index
    %c0_15 = arith.constant 0 : index
    %24 = vector.load %arg6[%c0_14, %c18, %c0_15] : memref<4x54x256xf32, #tpu.memory_space<vmem>>, vector<4x6x256xf32>
    tpu.vector_store %arg6[%c0_14, %c18, %c0_15], %23 {strides = array<i32>} : memref<4x54x256xf32, #tpu.memory_space<vmem>>, vector<4x6x256xf32>,
    %c0_16 = arith.constant 0 : index
    %c24 = arith.constant 24 : index
    %c0_17 = arith.constant 0 : index
    %25 = vector.load %arg6[%c0_16, %c24, %c0_17] : memref<4x54x256xf32, #tpu.memory_space<vmem>>, vector<4x6x256xf32>
    tpu.vector_store %arg6[%c0_16, %c24, %c0_17], %0 {strides = array<i32>} : memref<4x54x256xf32, #tpu.memory_space<vmem>>, vector<4x6x256xf32>,
    %c255_i32 = arith.constant 255 : i32
    %26 = tpu.dynamic_rotate %0 by %c255_i32 dim 2 : vector<4x6x256xf32>, i32 -> vector<4x6x256xf32>
    %c5 = arith.constant 5 : index
    %c0_18 = arith.constant 0 : index
    %27 = vector.load %arg4[%c5, %c0_18] : memref<9x256xf32, #tpu.memory_space<vmem>>, vector<1x256xf32>
    %28 = vector.shape_cast %27 : vector<1x256xf32> to vector<1x1x256xf32>
    %29 = vector.broadcast %28 : vector<1x1x256xf32> to vector<4x6x256xf32>
    %30 = arith.mulf %26, %29 : vector<4x6x256xf32>
    %c0_19 = arith.constant 0 : index
    %c30 = arith.constant 30 : index
    %c0_20 = arith.constant 0 : index
    %31 = vector.load %arg6[%c0_19, %c30, %c0_20] : memref<4x54x256xf32, #tpu.memory_space<vmem>>, vector<4x6x256xf32>
    tpu.vector_store %arg6[%c0_19, %c30, %c0_20], %30 {strides = array<i32>} : memref<4x54x256xf32, #tpu.memory_space<vmem>>, vector<4x6x256xf32>,
    %c241_i32 = arith.constant 241 : i32
    %32 = tpu.dynamic_rotate %0 by %c241_i32 dim 2 : vector<4x6x256xf32>, i32 -> vector<4x6x256xf32>
    %c6_21 = arith.constant 6 : index
    %c0_22 = arith.constant 0 : index
    %33 = vector.load %arg4[%c6_21, %c0_22] : memref<9x256xf32, #tpu.memory_space<vmem>>, vector<1x256xf32>
    %34 = vector.shape_cast %33 : vector<1x256xf32> to vector<1x1x256xf32>
    %35 = vector.broadcast %34 : vector<1x1x256xf32> to vector<4x6x256xf32>
    %36 = arith.mulf %32, %35 : vector<4x6x256xf32>
    %c0_23 = arith.constant 0 : index
    %c36 = arith.constant 36 : index
    %c0_24 = arith.constant 0 : index
    %37 = vector.load %arg6[%c0_23, %c36, %c0_24] : memref<4x54x256xf32, #tpu.memory_space<vmem>>, vector<4x6x256xf32>
    tpu.vector_store %arg6[%c0_23, %c36, %c0_24], %36 {strides = array<i32>} : memref<4x54x256xf32, #tpu.memory_space<vmem>>, vector<4x6x256xf32>,
    %c240_i32 = arith.constant 240 : i32
    %38 = tpu.dynamic_rotate %0 by %c240_i32 dim 2 : vector<4x6x256xf32>, i32 -> vector<4x6x256xf32>
    %c7 = arith.constant 7 : index
    %c0_25 = arith.constant 0 : index
    %39 = vector.load %arg4[%c7, %c0_25] : memref<9x256xf32, #tpu.memory_space<vmem>>, vector<1x256xf32>
    %40 = vector.shape_cast %39 : vector<1x256xf32> to vector<1x1x256xf32>
    %41 = vector.broadcast %40 : vector<1x1x256xf32> to vector<4x6x256xf32>
    %42 = arith.mulf %38, %41 : vector<4x6x256xf32>
    %c0_26 = arith.constant 0 : index
    %c42 = arith.constant 42 : index
    %c0_27 = arith.constant 0 : index
    %43 = vector.load %arg6[%c0_26, %c42, %c0_27] : memref<4x54x256xf32, #tpu.memory_space<vmem>>, vector<4x6x256xf32>
    tpu.vector_store %arg6[%c0_26, %c42, %c0_27], %42 {strides = array<i32>} : memref<4x54x256xf32, #tpu.memory_space<vmem>>, vector<4x6x256xf32>,
    %c239_i32 = arith.constant 239 : i32
    %44 = tpu.dynamic_rotate %0 by %c239_i32 dim 2 : vector<4x6x256xf32>, i32 -> vector<4x6x256xf32>
    %c8 = arith.constant 8 : index
    %c0_28 = arith.constant 0 : index
    %45 = vector.load %arg4[%c8, %c0_28] : memref<9x256xf32, #tpu.memory_space<vmem>>, vector<1x256xf32>
    %46 = vector.shape_cast %45 : vector<1x256xf32> to vector<1x1x256xf32>
    %47 = vector.broadcast %46 : vector<1x1x256xf32> to vector<4x6x256xf32>
    %48 = arith.mulf %44, %47 : vector<4x6x256xf32>
    %c0_29 = arith.constant 0 : index
    %c48 = arith.constant 48 : index
    %c0_30 = arith.constant 0 : index
    %49 = vector.load %arg6[%c0_29, %c48, %c0_30] : memref<4x54x256xf32, #tpu.memory_space<vmem>>, vector<4x6x256xf32>
    tpu.vector_store %arg6[%c0_29, %c48, %c0_30], %48 {strides = array<i32>} : memref<4x54x256xf32, #tpu.memory_space<vmem>>, vector<4x6x256xf32>,
    %c0_31 = arith.constant 0 : index
    %c0_32 = arith.constant 0 : index
    %50 = vector.load %arg2[%c0_31, %c0_32] : memref<3x54xf32, #tpu.memory_space<vmem>>, vector<3x54xf32>
    %c0_33 = arith.constant 0 : index
    %c0_34 = arith.constant 0 : index
    %51 = vector.load %arg3[%c0_33, %c0_34] : memref<3x1xf32, #tpu.memory_space<vmem>>, vector<3x1xf32>
    %c0_i32 = arith.constant 0 : i32
    %c4_i32 = arith.constant 4 : i32
    %52 = arith.addi %c0_i32, %c4_i32 : i32
    %c1_i32_35 = arith.constant 1 : i32
    scf.for %arg7 = %c0_i32 to %52 step %c1_i32_35  : i32 {
      %c1_i32_37 = arith.constant 1 : i32
      %53 = arith.muli %arg7, %c1_i32_37 : i32
      %c0_i32_38 = arith.constant 0 : i32
      %54 = arith.addi %c0_i32_38, %53 : i32
      %55 = arith.index_cast %54 : i32 to index
      %c0_39 = arith.constant 0 : index
      %c0_40 = arith.constant 0 : index
      %56 = vector.load %arg6[%55, %c0_39, %c0_40] : memref<4x54x256xf32, #tpu.memory_space<vmem>>, vector<1x54x256xf32>
      %57 = vector.shape_cast %56 : vector<1x54x256xf32> to vector<54x256xf32>
      %cst = arith.constant dense<0.000000e+00> : vector<3x256xf32>
      %58 = tpu.matmul %50, %57, %cst {dimension_numbers = #tpu.dot_dimension_numbers<[1], [0], [0], [1], [0, 0, 1, 1], [], []>} : vector<3x54xf32>, vector<54x256xf32>, vector<3x256xf32> -> vector<3x256xf32>
      %59 = vector.broadcast %51 : vector<3x1xf32> to vector<3x256xf32>
      %60 = arith.addf %58, %59 : vector<3x256xf32>
      %61 = vector.extract_strided_slice %57 {offsets = [24, 0], sizes = [3, 256], strides = [1, 1]} : vector<54x256xf32> to vector<3x256xf32>
      %62 = arith.addf %60, %61 : vector<3x256xf32>
      %63 = arith.index_cast %54 : i32 to index
      %c0_41 = arith.constant 0 : index
      %c0_42 = arith.constant 0 : index
      %64 = vector.load %arg5[%63, %c0_41, %c0_42] : memref<4x3x256xf32, #tpu.memory_space<vmem>>, vector<1x3x256xf32>
      %65 = vector.shape_cast %64 : vector<1x3x256xf32> to vector<3x256xf32>
      %66 = vector.shape_cast %62 : vector<3x256xf32> to vector<1x3x256xf32>
      tpu.vector_store %arg5[%63, %c0_41, %c0_42], %66 {strides = array<i32>} : memref<4x3x256xf32, #tpu.memory_space<vmem>>, vector<1x3x256xf32>,
    }
    %c4_i32_36 = arith.constant 4 : i32
    return
  }
  func.func @transform_0(%arg0: i32) -> (i32, i32, i32) {
    %c0_i32 = arith.constant 0 : i32
    %c0_i32_0 = arith.constant 0 : i32
    %c0_i32_1 = arith.constant 0 : i32
    return %arg0, %c0_i32, %c0_i32_0 : i32, i32, i32
  }
  func.func @transform_1(%arg0: i32) -> (i32, i32) {
    %c0_i32 = arith.constant 0 : i32
    %c0_i32_0 = arith.constant 0 : i32
    %c0_i32_1 = arith.constant 0 : i32
    return %c0_i32, %c0_i32_0 : i32, i32
  }
  func.func @transform_2(%arg0: i32) -> (i32, i32) {
    %c0_i32 = arith.constant 0 : i32
    %c0_i32_0 = arith.constant 0 : i32
    %c0_i32_1 = arith.constant 0 : i32
    return %c0_i32, %c0_i32_0 : i32, i32
  }
  func.func @transform_3(%arg0: i32) -> (i32, i32) {
    %c0_i32 = arith.constant 0 : i32
    %c0_i32_0 = arith.constant 0 : i32
    %c0_i32_1 = arith.constant 0 : i32
    return %c0_i32, %c0_i32_0 : i32, i32
  }
  func.func @transform_4(%arg0: i32) -> (i32, i32, i32) {
    %c0_i32 = arith.constant 0 : i32
    %c0_i32_0 = arith.constant 0 : i32
    %c0_i32_1 = arith.constant 0 : i32
    return %arg0, %c0_i32, %c0_i32_0 : i32, i32, i32
  }
}

</mosaic_0001>

<llo_original>
// kernel: tpu_custom_call.1
$region0: #{tpu_custom_call.1}
  #allocation0 [shape = 'u32[]', space=smem, size = 0x4, offset = 0x4, fixed_abs, tag = 'smem constant byte address 0x4 - core index']
  #allocation1 [shape = 'u32[144,128]{1,0:T(1,128)}', space=vmem, size = 0x12000, scoped, tag = 'internal scratch']
  #allocation2 [shape = 'f32[4,54,256]{2,1,0:T(8,128)}', space=vmem, size = 0x38000, scoped, tag = 'scratch operand']
  %s0 = inlined_call_operand.vmem [shape: f32[4,6,256], index: 0, kind: input, shape index: {}]
  %s1 = inlined_call_operand.vmem [shape: f32[3,54], index: 1, kind: input, shape index: {}]
  %s2 = inlined_call_operand.vmem [shape: f32[3,1], index: 2, kind: input, shape index: {}]
  %s3 = inlined_call_operand.vmem [shape: f32[9,256], index: 3, kind: input, shape index: {}]
  %s4 = inlined_call_operand.vmem [shape: f32[4,3,256], index: 4, kind: output, shape index: {}]
  %s5 = sld [smem:[#allocation0]]
  $region33: #{tpu_custom_call.1} parent=0
    _
  %s7 = ssub.s32 1, %s5
  %s8 = scalar_select 0, %s7, %s5
  // Predicated region
  $region2: #{tpu_custom_call.1} parent=0 // pred_check
    _
  $region3: #{tpu_custom_call.1} parent=0 // pred_check_branch
    %10 = sbr.rel (0) target = $region5
  $region4: #{tpu_custom_call.1} parent=0 // pred_region
    _
  $region5: #{tpu_custom_call.1} parent=0 // pred_fallthru
    _
  // Predicated region
  $region6: #{tpu_custom_call.1} parent=0 // pred_check
    _
  $region7: #{tpu_custom_call.1} parent=0 // pred_check_branch
    %12 = sbr.rel (0) target = $region9
  $region8: #{tpu_custom_call.1} parent=0 // pred_region
    _
  $region9: #{tpu_custom_call.1} parent=0 // pred_fallthru
    _
  // Predicated region
  $region10: #{tpu_custom_call.1} parent=0 // pred_check
    _
  $region11: #{tpu_custom_call.1} parent=0 // pred_check_branch
    %14 = sbr.rel (0) target = $region13
  $region12: #{tpu_custom_call.1} parent=0 // pred_region
    _
  $region13: #{tpu_custom_call.1} parent=0 // pred_fallthru
    _
  // Predicated region
  $region14: #{tpu_custom_call.1} parent=0 // pred_check
    _
  $region15: #{tpu_custom_call.1} parent=0 // pred_check_branch
    %16 = sbr.rel (0) target = $region17
  $region16: #{tpu_custom_call.1} parent=0 // pred_region
    _
  $region17: #{tpu_custom_call.1} parent=0 // pred_fallthru
    _
  %v17 = vld [vmem:[%s0] sm:$0x3f]
  %v18 = vld [vmem:[%s0 + $0x8] sm:$0x3f]
  %v19 = vld [vmem:[%s0 + $0x10] sm:$0x3f]
  %v20 = vld [vmem:[%s0 + $0x18] sm:$0x3f]
  %v21 = vld [vmem:[%s0 + $0x20] sm:$0x3f]
  %v22 = vld [vmem:[%s0 + $0x28] sm:$0x3f]
  %v23 = vld [vmem:[%s0 + $0x30] sm:$0x3f]
  %v24 = vld [vmem:[%s0 + $0x38] sm:$0x3f]
  %25 = vrot.lane.b32.xlu0 %v17, 17
  %v26 = vpop.permute.xlu0 %25
  %27 = vrot.lane.b32.xlu0 %v19, 17
  %v28 = vpop.permute.xlu0 %27
  %29 = vrot.lane.b32.xlu0 %v21, 17
  %v30 = vpop.permute.xlu0 %29
  %31 = vrot.lane.b32.xlu0 %v23, 17
  %v32 = vpop.permute.xlu0 %31
  %33 = vrot.lane.b32.xlu0 %v18, 17
  %v34 = vpop.permute.xlu0 %33
  %35 = vrot.lane.b32.xlu0 %v20, 17
  %v36 = vpop.permute.xlu0 %35
  %37 = vrot.lane.b32.xlu0 %v22, 17
  %v38 = vpop.permute.xlu0 %37
  %39 = vrot.lane.b32.xlu0 %v24, 17
  %v40 = vpop.permute.xlu0 %39
  %v41 = vlaneseq
  %v42 = vand.u32 %v41, 127
  %vm43 = vcmp.lt.s32.totalorder %v42, 17
  %v44 = vsel %vm43, %v26, %v34
  %v45 = vsel %vm43, %v28, %v36
  %v46 = vsel %vm43, %v30, %v38
  %v47 = vsel %vm43, %v32, %v40
  %v48 = vsel %vm43, %v34, %v26
  %v49 = vsel %vm43, %v36, %v28
  %v50 = vsel %vm43, %v38, %v30
  %v51 = vsel %vm43, %v40, %v32
  %v52 = vld [vmem:[%s3] ss:$8 sm:$0x3]
  %v54 = vlaneseq
  %v55 = vshrl.u32 %v54, 7
  %v56 = vsub.s32 0, %v55
  %v57 = vrot.slane %v52, %v56
  %v58 = vlaneseq
  %v59 = vshrl.u32 %v58, 7
  %v60 = vsub.s32 1, %v59
  %v61 = vrot.slane %v52, %v60
  %v64 = vmul.f32 %v48, %v57
  %v65 = vmul.f32 %v44, %v61
  %v66 = vmul.f32 %v49, %v57
  %v67 = vmul.f32 %v45, %v61
  %v68 = vmul.f32 %v50, %v57
  %v69 = vmul.f32 %v46, %v61
  %v70 = vmul.f32 %v51, %v57
  %v71 = vmul.f32 %v47, %v61
  %72 = vst [vmem:[#allocation2] sm:$0x3f] %v64
  %73 = vst [vmem:[#allocation2 + $0x8] sm:$0x3f] %v65
  %74 = vst [vmem:[#allocation2 + $0x70] sm:$0x3f] %v66
  %75 = vst [vmem:[#allocation2 + $0x78] sm:$0x3f] %v67
  %76 = vst [vmem:[#allocation2 + $0xe0] sm:$0x3f] %v68
  %77 = vst [vmem:[#allocation2 + $0xe8] sm:$0x3f] %v69
  %78 = vst [vmem:[#allocation2 + $0x150] sm:$0x3f] %v70
  %79 = vst [vmem:[#allocation2 + $0x158] sm:$0x3f] %v71
  %80 = vrot.lane.b32.xlu0 %v17, 16
  %v81 = vpop.permute.xlu0 %80
  %82 = vrot.lane.b32.xlu0 %v19, 16
  %v83 = vpop.permute.xlu0 %82
  %84 = vrot.lane.b32.xlu0 %v21, 16
  %v85 = vpop.permute.xlu0 %84
  %86 = vrot.lane.b32.xlu0 %v23, 16
  %v87 = vpop.permute.xlu0 %86
  %88 = vrot.lane.b32.xlu0 %v18, 16
  %v89 = vpop.permute.xlu0 %88
  %90 = vrot.lane.b32.xlu0 %v20, 16
  %v91 = vpop.permute.xlu0 %90
  %92 = vrot.lane.b32.xlu0 %v22, 16
  %v93 = vpop.permute.xlu0 %92
  %94 = vrot.lane.b32.xlu0 %v24, 16
  %v95 = vpop.permute.xlu0 %94
  %vm96 = vcmp.lt.s32.totalorder %v42, 16
  %v97 = vsel %vm96, %v81, %v89
  %v98 = vsel %vm96, %v83, %v91
  %v99 = vsel %vm96, %v85, %v93
  %v100 = vsel %vm96, %v87, %v95
  %v101 = vsel %vm96, %v89, %v81
  %v102 = vsel %vm96, %v91, %v83
  %v103 = vsel %vm96, %v93, %v85
  %v104 = vsel %vm96, %v95, %v87
  %s105 = scalar_lea.vmem %s3, 1
  %v106 = vld [vmem:[%s105] ss:$8 sm:$0x3]
  %v108 = vlaneseq
  %v109 = vshrl.u32 %v108, 7
  %v110 = vsub.s32 0, %v109
  %v111 = vrot.slane %v106, %v110
  %v112 = vlaneseq
  %v113 = vshrl.u32 %v112, 7
  %v114 = vsub.s32 1, %v113
  %v115 = vrot.slane %v106, %v114
  %v118 = vmul.f32 %v101, %v111
  %v119 = vmul.f32 %v97, %v115
  %v120 = vmul.f32 %v102, %v111
  %v121 = vmul.f32 %v98, %v115
  %v122 = vmul.f32 %v103, %v111
  %v123 = vmul.f32 %v99, %v115
  %v124 = vmul.f32 %v104, %v111
  %v125 = vmul.f32 %v100, %v115
  %v134 = vrot.slane %v118, 2
  %v135 = vrot.slane %v119, 2
  %v136 = vrot.slane %v120, 2
  %v137 = vrot.slane %v121, 2
  %v138 = vrot.slane %v122, 2
  %v139 = vrot.slane %v123, 2
  %v140 = vrot.slane %v124, 2
  %v141 = vrot.slane %v125, 2
  %150 = vst [vmem:[#allocation2] sm:$0xc0] %v134
  %151 = vst [vmem:[#allocation2 + $0x8] sm:$0xc0] %v135
  %152 = vst [vmem:[#allocation2 + $0x10] sm:$0xf] %v134
  %153 = vst [vmem:[#allocation2 + $0x18] sm:$0xf] %v135
  %154 = vst [vmem:[#allocation2 + $0x70] sm:$0xc0] %v136
  %155 = vst [vmem:[#allocation2 + $0x78] sm:$0xc0] %v137
  %156 = vst [vmem:[#allocation2 + $0x80] sm:$0xf] %v136
  %157 = vst [vmem:[#allocation2 + $0x88] sm:$0xf] %v137
  %158 = vst [vmem:[#allocation2 + $0xe0] sm:$0xc0] %v138
  %159 = vst [vmem:[#allocation2 + $0xe8] sm:$0xc0] %v139
  %160 = vst [vmem:[#allocation2 + $0xf0] sm:$0xf] %v138
  %161 = vst [vmem:[#allocation2 + $0xf8] sm:$0xf] %v139
  %162 = vst [vmem:[#allocation2 + $0x150] sm:$0xc0] %v140
  %163 = vst [vmem:[#allocation2 + $0x158] sm:$0xc0] %v141
  %164 = vst [vmem:[#allocation2 + $0x160] sm:$0xf] %v140
  %165 = vst [vmem:[#allocation2 + $0x168] sm:$0xf] %v141
  %166 = vrot.lane.b32.xlu0 %v17, 15
  %v167 = vpop.permute.xlu0 %166
  %168 = vrot.lane.b32.xlu0 %v19, 15
  %v169 = vpop.permute.xlu0 %168
  %170 = vrot.lane.b32.xlu0 %v21, 15
  %v171 = vpop.permute.xlu0 %170
  %172 = vrot.lane.b32.xlu0 %v23, 15
  %v173 = vpop.permute.xlu0 %172
  %174 = vrot.lane.b32.xlu0 %v18, 15
  %v175 = vpop.permute.xlu0 %174
  %176 = vrot.lane.b32.xlu0 %v20, 15
  %v177 = vpop.permute.xlu0 %176
  %178 = vrot.lane.b32.xlu0 %v22, 15
  %v179 = vpop.permute.xlu0 %178
  %180 = vrot.lane.b32.xlu0 %v24, 15
  %v181 = vpop.permute.xlu0 %180
  %vm182 = vcmp.lt.s32.totalorder %v42, 15
  %v183 = vsel %vm182, %v167, %v175
  %v184 = vsel %vm182, %v169, %v177
  %v185 = vsel %vm182, %v171, %v179
  %v186 = vsel %vm182, %v173, %v181
  %v187 = vsel %vm182, %v175, %v167
  %v188 = vsel %vm182, %v177, %v169
  %v189 = vsel %vm182, %v179, %v171
  %v190 = vsel %vm182, %v181, %v173
  %s191 = scalar_lea.vmem %s3, 2
  %v192 = vld [vmem:[%s191] ss:$8 sm:$0x3]
  %v194 = vlaneseq
  %v195 = vshrl.u32 %v194, 7
  %v196 = vsub.s32 0, %v195
  %v197 = vrot.slane %v192, %v196
  %v198 = vlaneseq
  %v199 = vshrl.u32 %v198, 7
  %v200 = vsub.s32 1, %v199
  %v201 = vrot.slane %v192, %v200
  %v204 = vmul.f32 %v187, %v197
  %v205 = vmul.f32 %v183, %v201
  %v206 = vmul.f32 %v188, %v197
  %v207 = vmul.f32 %v184, %v201
  %v208 = vmul.f32 %v189, %v197
  %v209 = vmul.f32 %v185, %v201
  %v210 = vmul.f32 %v190, %v197
  %v211 = vmul.f32 %v186, %v201
  %v220 = vrot.slane %v204, 4
  %v221 = vrot.slane %v205, 4
  %v222 = vrot.slane %v206, 4
  %v223 = vrot.slane %v207, 4
  %v224 = vrot.slane %v208, 4
  %v225 = vrot.slane %v209, 4
  %v226 = vrot.slane %v210, 4
  %v227 = vrot.slane %v211, 4
  %236 = vst [vmem:[#allocation2 + $0x10] sm:$0xf0] %v220
  %237 = vst [vmem:[#allocation2 + $0x18] sm:$0xf0] %v221
  %238 = vst [vmem:[#allocation2 + $0x20] sm:$0x3] %v220
  %239 = vst [vmem:[#allocation2 + $0x28] sm:$0x3] %v221
  %240 = vst [vmem:[#allocation2 + $0x80] sm:$0xf0] %v222
  %241 = vst [vmem:[#allocation2 + $0x88] sm:$0xf0] %v223
  %242 = vst [vmem:[#allocation2 + $0x90] sm:$0x3] %v222
  %243 = vst [vmem:[#allocation2 + $0x98] sm:$0x3] %v223
  %244 = vst [vmem:[#allocation2 + $0xf0] sm:$0xf0] %v224
  %245 = vst [vmem:[#allocation2 + $0xf8] sm:$0xf0] %v225
  %246 = vst [vmem:[#allocation2 + $0x100] sm:$0x3] %v224
  %247 = vst [vmem:[#allocation2 + $0x108] sm:$0x3] %v225
  %248 = vst [vmem:[#allocation2 + $0x160] sm:$0xf0] %v226
  %249 = vst [vmem:[#allocation2 + $0x168] sm:$0xf0] %v227
  %250 = vst [vmem:[#allocation2 + $0x170] sm:$0x3] %v226
  %251 = vst [vmem:[#allocation2 + $0x178] sm:$0x3] %v227
  %252 = vrot.lane.b32.xlu0 %v17, 1
  %v253 = vpop.permute.xlu0 %252
  %254 = vrot.lane.b32.xlu0 %v19, 1
  %v255 = vpop.permute.xlu0 %254
  %256 = vrot.lane.b32.xlu0 %v21, 1
  %v257 = vpop.permute.xlu0 %256
  %258 = vrot.lane.b32.xlu0 %v23, 1
  %v259 = vpop.permute.xlu0 %258
  %260 = vrot.lane.b32.xlu0 %v18, 1
  %v261 = vpop.permute.xlu0 %260
  %262 = vrot.lane.b32.xlu0 %v20, 1
  %v263 = vpop.permute.xlu0 %262
  %264 = vrot.lane.b32.xlu0 %v22, 1
  %v265 = vpop.permute.xlu0 %264
  %266 = vrot.lane.b32.xlu0 %v24, 1
  %v267 = vpop.permute.xlu0 %266
  %vm268 = vcmp.lt.s32.totalorder %v42, 1
  %v269 = vsel %vm268, %v253, %v261
  %v270 = vsel %vm268, %v255, %v263
  %v271 = vsel %vm268, %v257, %v265
  %v272 = vsel %vm268, %v259, %v267
  %v273 = vsel %vm268, %v261, %v253
  %v274 = vsel %vm268, %v263, %v255
  %v275 = vsel %vm268, %v265, %v257
  %v276 = vsel %vm268, %v267, %v259
  %s277 = scalar_lea.vmem %s3, 3
  %v278 = vld [vmem:[%s277] ss:$8 sm:$0x3]
  %v280 = vlaneseq
  %v281 = vshrl.u32 %v280, 7
  %v282 = vsub.s32 0, %v281
  %v283 = vrot.slane %v278, %v282
  %v284 = vlaneseq
  %v285 = vshrl.u32 %v284, 7
  %v286 = vsub.s32 1, %v285
  %v287 = vrot.slane %v278, %v286
  %v290 = vmul.f32 %v273, %v283
  %v291 = vmul.f32 %v269, %v287
  %v292 = vmul.f32 %v274, %v283
  %v293 = vmul.f32 %v270, %v287
  %v294 = vmul.f32 %v275, %v283
  %v295 = vmul.f32 %v271, %v287
  %v296 = vmul.f32 %v276, %v283
  %v297 = vmul.f32 %v272, %v287
  %v306 = vrot.slane %v290, 6
  %v307 = vrot.slane %v291, 6
  %v308 = vrot.slane %v292, 6
  %v309 = vrot.slane %v293, 6
  %v310 = vrot.slane %v294, 6
  %v311 = vrot.slane %v295, 6
  %v312 = vrot.slane %v296, 6
  %v313 = vrot.slane %v297, 6
  %322 = vst [vmem:[#allocation2 + $0x20] sm:$0xfc] %v306
  %323 = vst [vmem:[#allocation2 + $0x28] sm:$0xfc] %v307
  %324 = vst [vmem:[#allocation2 + $0x90] sm:$0xfc] %v308
  %325 = vst [vmem:[#allocation2 + $0x98] sm:$0xfc] %v309
  %326 = vst [vmem:[#allocation2 + $0x100] sm:$0xfc] %v310
  %327 = vst [vmem:[#allocation2 + $0x108] sm:$0xfc] %v311
  %328 = vst [vmem:[#allocation2 + $0x170] sm:$0xfc] %v312
  %329 = vst [vmem:[#allocation2 + $0x178] sm:$0xfc] %v313
  %330 = vst [vmem:[#allocation2 + $0x30] sm:$0x3f] %v17
  %331 = vst [vmem:[#allocation2 + $0x38] sm:$0x3f] %v18
  %332 = vst [vmem:[#allocation2 + $0xa0] sm:$0x3f] %v19
  %333 = vst [vmem:[#allocation2 + $0xa8] sm:$0x3f] %v20
  %334 = vst [vmem:[#allocation2 + $0x110] sm:$0x3f] %v21
  %335 = vst [vmem:[#allocation2 + $0x118] sm:$0x3f] %v22
  %336 = vst [vmem:[#allocation2 + $0x180] sm:$0x3f] %v23
  %337 = vst [vmem:[#allocation2 + $0x188] sm:$0x3f] %v24
  %338 = vrot.lane.b32.xlu0 %v17, 127
  %v339 = vpop.permute.xlu0 %338
  %340 = vrot.lane.b32.xlu0 %v19, 127
  %v341 = vpop.permute.xlu0 %340
  %342 = vrot.lane.b32.xlu0 %v21, 127
  %v343 = vpop.permute.xlu0 %342
  %344 = vrot.lane.b32.xlu0 %v23, 127
  %v345 = vpop.permute.xlu0 %344
  %346 = vrot.lane.b32.xlu0 %v18, 127
  %v347 = vpop.permute.xlu0 %346
  %348 = vrot.lane.b32.xlu0 %v20, 127
  %v349 = vpop.permute.xlu0 %348
  %350 = vrot.lane.b32.xlu0 %v22, 127
  %v351 = vpop.permute.xlu0 %350
  %352 = vrot.lane.b32.xlu0 %v24, 127
  %v353 = vpop.permute.xlu0 %352
  %vm354 = vcmp.lt.s32.totalorder %v42, 127
  %v355 = vsel %vm354, %v339, %v347
  %v356 = vsel %vm354, %v341, %v349
  %v357 = vsel %vm354, %v343, %v351
  %v358 = vsel %vm354, %v345, %v353
  %v359 = vsel %vm354, %v347, %v339
  %v360 = vsel %vm354, %v349, %v341
  %v361 = vsel %vm354, %v351, %v343
  %v362 = vsel %vm354, %v353, %v345
  %s363 = scalar_lea.vmem %s3, 5
  %v364 = vld [vmem:[%s363] ss:$8 sm:$0x3]
  %v366 = vlaneseq
  %v367 = vshrl.u32 %v366, 7
  %v368 = vsub.s32 0, %v367
  %v369 = vrot.slane %v364, %v368
  %v370 = vlaneseq
  %v371 = vshrl.u32 %v370, 7
  %v372 = vsub.s32 1, %v371
  %v373 = vrot.slane %v364, %v372
  %v376 = vmul.f32 %v355, %v369
  %v377 = vmul.f32 %v359, %v373
  %v378 = vmul.f32 %v356, %v369
  %v379 = vmul.f32 %v360, %v373
  %v380 = vmul.f32 %v357, %v369
  %v381 = vmul.f32 %v361, %v373
  %v382 = vmul.f32 %v358, %v369
  %v383 = vmul.f32 %v362, %v373
  %v392 = vrot.slane %v376, 2
  %v393 = vrot.slane %v377, 2
  %v394 = vrot.slane %v378, 2
  %v395 = vrot.slane %v379, 2
  %v396 = vrot.slane %v380, 2
  %v397 = vrot.slane %v381, 2
  %v398 = vrot.slane %v382, 2
  %v399 = vrot.slane %v383, 2
  %408 = vst [vmem:[#allocation2 + $0x30] sm:$0xc0] %v392
  %409 = vst [vmem:[#allocation2 + $0x38] sm:$0xc0] %v393
  %410 = vst [vmem:[#allocation2 + $0x40] sm:$0xf] %v392
  %411 = vst [vmem:[#allocation2 + $0x48] sm:$0xf] %v393
  %412 = vst [vmem:[#allocation2 + $0xa0] sm:$0xc0] %v394
  %413 = vst [vmem:[#allocation2 + $0xa8] sm:$0xc0] %v395
  %414 = vst [vmem:[#allocation2 + $0xb0] sm:$0xf] %v394
  %415 = vst [vmem:[#allocation2 + $0xb8] sm:$0xf] %v395
  %416 = vst [vmem:[#allocation2 + $0x110] sm:$0xc0] %v396
  %417 = vst [vmem:[#allocation2 + $0x118] sm:$0xc0] %v397
  %418 = vst [vmem:[#allocation2 + $0x120] sm:$0xf] %v396
  %419 = vst [vmem:[#allocation2 + $0x128] sm:$0xf] %v397
  %420 = vst [vmem:[#allocation2 + $0x180] sm:$0xc0] %v398
  %421 = vst [vmem:[#allocation2 + $0x188] sm:$0xc0] %v399
  %422 = vst [vmem:[#allocation2 + $0x190] sm:$0xf] %v398
  %423 = vst [vmem:[#allocation2 + $0x198] sm:$0xf] %v399
  %424 = vrot.lane.b32.xlu0 %v17, 113
  %v425 = vpop.permute.xlu0 %424
  %426 = vrot.lane.b32.xlu0 %v19, 113
  %v427 = vpop.permute.xlu0 %426
  %428 = vrot.lane.b32.xlu0 %v21, 113
  %v429 = vpop.permute.xlu0 %428
  %430 = vrot.lane.b32.xlu0 %v23, 113
  %v431 = vpop.permute.xlu0 %430
  %432 = vrot.lane.b32.xlu0 %v18, 113
  %v433 = vpop.permute.xlu0 %432
  %434 = vrot.lane.b32.xlu0 %v20, 113
  %v435 = vpop.permute.xlu0 %434
  %436 = vrot.lane.b32.xlu0 %v22, 113
  %v437 = vpop.permute.xlu0 %436
  %438 = vrot.lane.b32.xlu0 %v24, 113
  %v439 = vpop.permute.xlu0 %438
  %vm440 = vcmp.lt.s32.totalorder %v42, 113
  %v441 = vsel %vm440, %v425, %v433
  %v442 = vsel %vm440, %v427, %v435
  %v443 = vsel %vm440, %v429, %v437
  %v444 = vsel %vm440, %v431, %v439
  %v445 = vsel %vm440, %v433, %v425
  %v446 = vsel %vm440, %v435, %v427
  %v447 = vsel %vm440, %v437, %v429
  %v448 = vsel %vm440, %v439, %v431
  %s449 = scalar_lea.vmem %s3, 6
  %v450 = vld [vmem:[%s449] ss:$8 sm:$0x3]
  %v452 = vlaneseq
  %v453 = vshrl.u32 %v452, 7
  %v454 = vsub.s32 0, %v453
  %v455 = vrot.slane %v450, %v454
  %v456 = vlaneseq
  %v457 = vshrl.u32 %v456, 7
  %v458 = vsub.s32 1, %v457
  %v459 = vrot.slane %v450, %v458
  %v462 = vmul.f32 %v441, %v455
  %v463 = vmul.f32 %v445, %v459
  %v464 = vmul.f32 %v442, %v455
  %v465 = vmul.f32 %v446, %v459
  %v466 = vmul.f32 %v443, %v455
  %v467 = vmul.f32 %v447, %v459
  %v468 = vmul.f32 %v444, %v455
  %v469 = vmul.f32 %v448, %v459
  %v478 = vrot.slane %v462, 4
  %v479 = vrot.slane %v463, 4
  %v480 = vrot.slane %v464, 4
  %v481 = vrot.slane %v465, 4
  %v482 = vrot.slane %v466, 4
  %v483 = vrot.slane %v467, 4
  %v484 = vrot.slane %v468, 4
  %v485 = vrot.slane %v469, 4
  %494 = vst [vmem:[#allocation2 + $0x40] sm:$0xf0] %v478
  %495 = vst [vmem:[#allocation2 + $0x48] sm:$0xf0] %v479
  %496 = vst [vmem:[#allocation2 + $0x50] sm:$0x3] %v478
  %497 = vst [vmem:[#allocation2 + $0x58] sm:$0x3] %v479
  %498 = vst [vmem:[#allocation2 + $0xb0] sm:$0xf0] %v480
  %499 = vst [vmem:[#allocation2 + $0xb8] sm:$0xf0] %v481
  %500 = vst [vmem:[#allocation2 + $0xc0] sm:$0x3] %v480
  %501 = vst [vmem:[#allocation2 + $0xc8] sm:$0x3] %v481
  %502 = vst [vmem:[#allocation2 + $0x120] sm:$0xf0] %v482
  %503 = vst [vmem:[#allocation2 + $0x128] sm:$0xf0] %v483
  %504 = vst [vmem:[#allocation2 + $0x130] sm:$0x3] %v482
  %505 = vst [vmem:[#allocation2 + $0x138] sm:$0x3] %v483
  %506 = vst [vmem:[#allocation2 + $0x190] sm:$0xf0] %v484
  %507 = vst [vmem:[#allocation2 + $0x198] sm:$0xf0] %v485
  %508 = vst [vmem:[#allocation2 + $0x1a0] sm:$0x3] %v484
  %509 = vst [vmem:[#allocation2 + $0x1a8] sm:$0x3] %v485
  %510 = vrot.lane.b32.xlu0 %v17, 112
  %v511 = vpop.permute.xlu0 %510
  %512 = vrot.lane.b32.xlu0 %v19, 112
  %v513 = vpop.permute.xlu0 %512
  %514 = vrot.lane.b32.xlu0 %v21, 112
  %v515 = vpop.permute.xlu0 %514
  %516 = vrot.lane.b32.xlu0 %v23, 112
  %v517 = vpop.permute.xlu0 %516
  %518 = vrot.lane.b32.xlu0 %v18, 112
  %v519 = vpop.permute.xlu0 %518
  %520 = vrot.lane.b32.xlu0 %v20, 112
  %v521 = vpop.permute.xlu0 %520
  %522 = vrot.lane.b32.xlu0 %v22, 112
  %v523 = vpop.permute.xlu0 %522
  %524 = vrot.lane.b32.xlu0 %v24, 112
  %v525 = vpop.permute.xlu0 %524
  %vm526 = vcmp.lt.s32.totalorder %v42, 112
  %v527 = vsel %vm526, %v511, %v519
  %v528 = vsel %vm526, %v513, %v521
  %v529 = vsel %vm526, %v515, %v523
  %v530 = vsel %vm526, %v517, %v525
  %v531 = vsel %vm526, %v519, %v511
  %v532 = vsel %vm526, %v521, %v513
  %v533 = vsel %vm526, %v523, %v515
  %v534 = vsel %vm526, %v525, %v517
  %s535 = scalar_lea.vmem %s3, 7
  %v536 = vld [vmem:[%s535] ss:$8 sm:$0x3]
  %v538 = vlaneseq
  %v539 = vshrl.u32 %v538, 7
  %v540 = vsub.s32 0, %v539
  %v541 = vrot.slane %v536, %v540
  %v542 = vlaneseq
  %v543 = vshrl.u32 %v542, 7
  %v544 = vsub.s32 1, %v543
  %v545 = vrot.slane %v536, %v544
  %v548 = vmul.f32 %v527, %v541
  %v549 = vmul.f32 %v531, %v545
  %v550 = vmul.f32 %v528, %v541
  %v551 = vmul.f32 %v532, %v545
  %v552 = vmul.f32 %v529, %v541
  %v553 = vmul.f32 %v533, %v545
  %v554 = vmul.f32 %v530, %v541
  %v555 = vmul.f32 %v534, %v545
  %v564 = vrot.slane %v548, 6
  %v565 = vrot.slane %v549, 6
  %v566 = vrot.slane %v550, 6
  %v567 = vrot.slane %v551, 6
  %v568 = vrot.slane %v552, 6
  %v569 = vrot.slane %v553, 6
  %v570 = vrot.slane %v554, 6
  %v571 = vrot.slane %v555, 6
  %580 = vst [vmem:[#allocation2 + $0x50] sm:$0xfc] %v564
  %581 = vst [vmem:[#allocation2 + $0x58] sm:$0xfc] %v565
  %582 = vst [vmem:[#allocation2 + $0xc0] sm:$0xfc] %v566
  %583 = vst [vmem:[#allocation2 + $0xc8] sm:$0xfc] %v567
  %584 = vst [vmem:[#allocation2 + $0x130] sm:$0xfc] %v568
  %585 = vst [vmem:[#allocation2 + $0x138] sm:$0xfc] %v569
  %586 = vst [vmem:[#allocation2 + $0x1a0] sm:$0xfc] %v570
  %587 = vst [vmem:[#allocation2 + $0x1a8] sm:$0xfc] %v571
  %588 = vrot.lane.b32.xlu0 %v17, 111
  %v589 = vpop.permute.xlu0 %588
  %590 = vrot.lane.b32.xlu0 %v19, 111
  %v591 = vpop.permute.xlu0 %590
  %592 = vrot.lane.b32.xlu0 %v21, 111
  %v593 = vpop.permute.xlu0 %592
  %594 = vrot.lane.b32.xlu0 %v23, 111
  %v595 = vpop.permute.xlu0 %594
  %596 = vrot.lane.b32.xlu0 %v18, 111
  %v597 = vpop.permute.xlu0 %596
  %598 = vrot.lane.b32.xlu0 %v20, 111
  %v599 = vpop.permute.xlu0 %598
  %600 = vrot.lane.b32.xlu0 %v22, 111
  %v601 = vpop.permute.xlu0 %600
  %602 = vrot.lane.b32.xlu0 %v24, 111
  %v603 = vpop.permute.xlu0 %602
  %vm604 = vcmp.lt.s32.totalorder %v42, 111
  %v605 = vsel %vm604, %v589, %v597
  %v606 = vsel %vm604, %v591, %v599
  %v607 = vsel %vm604, %v593, %v601
  %v608 = vsel %vm604, %v595, %v603
  %v609 = vsel %vm604, %v597, %v589
  %v610 = vsel %vm604, %v599, %v591
  %v611 = vsel %vm604, %v601, %v593
  %v612 = vsel %vm604, %v603, %v595
  %s613 = scalar_lea.vmem %s3, 16
  %v614 = vld [vmem:[%s613] ss:$8 sm:$0x3]
  %v616 = vlaneseq
  %v617 = vshrl.u32 %v616, 7
  %v618 = vsub.s32 0, %v617
  %v619 = vrot.slane %v614, %v618
  %v620 = vlaneseq
  %v621 = vshrl.u32 %v620, 7
  %v622 = vsub.s32 1, %v621
  %v623 = vrot.slane %v614, %v622
  %v626 = vmul.f32 %v605, %v619
  %v627 = vmul.f32 %v609, %v623
  %v628 = vmul.f32 %v606, %v619
  %v629 = vmul.f32 %v610, %v623
  %v630 = vmul.f32 %v607, %v619
  %v631 = vmul.f32 %v611, %v623
  %v632 = vmul.f32 %v608, %v619
  %v633 = vmul.f32 %v612, %v623
  %634 = vst [vmem:[#allocation2 + $0x60] sm:$0x3f] %v626
  %635 = vst [vmem:[#allocation2 + $0x68] sm:$0x3f] %v627
  %636 = vst [vmem:[#allocation2 + $0xd0] sm:$0x3f] %v628
  %637 = vst [vmem:[#allocation2 + $0xd8] sm:$0x3f] %v629
  %638 = vst [vmem:[#allocation2 + $0x140] sm:$0x3f] %v630
  %639 = vst [vmem:[#allocation2 + $0x148] sm:$0x3f] %v631
  %640 = vst [vmem:[#allocation2 + $0x1b0] sm:$0x3f] %v632
  %641 = vst [vmem:[#allocation2 + $0x1b8] sm:$0x3f] %v633
  %v642 = vld [vmem:[%s1] sm:$0x7]
  %v643 = vld [vmem:[%s2] sm:$0x7]
  loop: start=0, step=1, limit=4
  $region18: #{tpu_custom_call.1} parent=0 // loop_pre_header
    _
  $region19: #{tpu_custom_call.1} parent=0 // loop_header
    %s645 = sphi 0, %s649
    %p646 = scmp.ge.s32.totalorder %s645, 4
  $region20: #{tpu_custom_call.1} parent=0 // loop_header_branch
    %648 = sbr.rel (%p646) target = $region24
  $region21: #{tpu_custom_call.1} parent=0 // loop_body
    %s650 = smul.u32 %s645, 14
    %s651 = smul.addr %s650, 8
    %s652 = scalar_lea.vmem [#allocation2], %s651
    %v653 = vld [vmem:[%s652] sm:$0xff]
    %v654 = vld [vmem:[%s652 + $0x8] sm:$0xff]
    %v655 = vld [vmem:[%s652 + $0x10] sm:$0xff]
    %v656 = vld [vmem:[%s652 + $0x18] sm:$0xff]
    %v657 = vld [vmem:[%s652 + $0x20] sm:$0xff]
    %v658 = vld [vmem:[%s652 + $0x28] sm:$0xff]
    %v659 = vld [vmem:[%s652 + $0x30] sm:$0xff]
    %v660 = vld [vmem:[%s652 + $0x38] sm:$0xff]
    %v661 = vld [vmem:[%s652 + $0x40] sm:$0xff]
    %v662 = vld [vmem:[%s652 + $0x48] sm:$0xff]
    %v663 = vld [vmem:[%s652 + $0x50] sm:$0xff]
    %v664 = vld [vmem:[%s652 + $0x58] sm:$0xff]
    %v665 = vld [vmem:[%s652 + $0x60] sm:$0x3f]
    %v666 = vld [vmem:[%s652 + $0x68] sm:$0x3f]
    %668 = vset.pattern.permute.xlu0 0
    %669 = vperm.xlu0 %668, %v643
    %v670 = vpop.permute.xlu0 %669
    %vm672 = vcmask 441344
    %v674 = vsel %vm672, %v642, 0
    %vm676 = vcmask 1045504
    %v678 = vsel %vm676, %v665, 0
    %v681 = vsel %vm676, %v666, 0
    %683 = vmatprep.subr.mxu0 %v654
    %684 = vmatpush1.msra.mxu0 %v653
    %685 = vmatprep.subr.mxu0 %v656
    %686 = vmatpush1.msra.mxu0 %v655
    %687 = vmatprep.subr.mxu0 %v658
    %688 = vmatpush1.msra.mxu0 %v657
    %689 = vmatprep.subr.mxu0 %v660
    %690 = vmatpush1.msra.mxu0 %v659
    %691 = vmatprep.subr.mxu0 %v662
    %692 = vmatpush1.msra.mxu0 %v661
    %693 = vmatprep.subr.mxu0 %v664
    %694 = vmatpush1.msra.mxu0 %v663
    %695 = vmatprep.subr.mxu0 %v681
    %696 = vmatpush1.msra.mxu0 %v678
    %697 = vmatprep.subr.mxu0 0.0
    %698 = vmatpush1.msra.mxu0 0.0
    %699 = vmatprep.subr.mxu0 0.0
    %700 = vmatpush1.msra.mxu0 0.0
    %701 = vmatprep.subr.mxu0 0.0
    %702 = vmatpush1.msra.mxu0 0.0
    %703 = vmatprep.subr.mxu0 0.0
    %704 = vmatpush1.msra.mxu0 0.0
    %705 = vmatprep.subr.mxu0 0.0
    %706 = vmatpush1.msra.mxu0 0.0
    %707 = vmatprep.subr.mxu0 0.0
    %708 = vmatpush1.msra.mxu0 0.0
    %709 = vmatprep.subr.mxu0 0.0
    %710 = vmatpush1.msra.mxu0 0.0
    %711 = vmatprep.subr.mxu0 0.0
    %712 = vmatpush1.msra.mxu0 0.0
    %713 = vmatprep.subr.mxu0 0.0
    %714 = vmatpush1.msra.mxu0 0.0
    %715 = vmatprep.subr.mxu0 0.0
    %716 = vmatpush1.msra.mxu0 0.0
    %717 = vmatprep.subr.mxu0 0.0
    %718 = vmatpush1.msra.mxu0 0.0
    %719 = vmatprep.subr.mxu0 0.0
    %720 = vmatpush1.msra.mxu0 0.0
    %721 = vmatprep.subr.mxu0 0.0
    %722 = vmatpush1.msra.mxu0 0.0
    %723 = vmatprep.subr.mxu0 0.0
    %724 = vmatpush1.msra.mxu0 0.0
    %725 = vmatprep.subr.mxu0 0.0
    %726 = vmatpush1.msra.mxu0 0.0
    %727 = vmatprep.subr.mxu0 0.0
    %728 = vmatpush1.msra.mxu0 0.0
    %729 = vmatprep.subr.mxu0 0.0
    %730 = vmatpush1.msra.mxu0 0.0
    %731 = vmatprep.subr.mxu0 0.0
    %732 = vmatpush1.msra.mxu0 0.0
    %733 = vmatprep.subr.mxu0 0.0
    %734 = vmatpush1.msra.mxu0 0.0
    %735 = vmatprep.subr.mxu0 0.0
    %736 = vmatpush1.msra.mxu0 0.0
    %737 = vmatprep.subr.mxu0 0.0
    %738 = vmatpush1.msra.mxu0 0.0
    %739 = vmatprep.subr.mxu0 0.0
    %740 = vmatpush1.msra.mxu0 0.0
    %741 = vmatprep.subr.mxu0 0.0
    %742 = vmatpush1.msra.mxu0 0.0
    %743 = vmatprep.subr.mxu0 0.0
    %744 = vmatpush1.msra.mxu0 0.0
    %745 = vmatprep.subr.mxu0 0.0
    %746 = vmatpush1.msra.mxu0 0.0
    %747 = vmatprep.mubr.f32.mxu0 0.0
    %748 = vmatmul.mubr.f32.gmra.mrb[0].mxu0 %v674
    %v749 = vpop.f32.mrb[0].mxu0
    %v750 = vadd.f32 %v670, %v749
    %v751 = vpop.f32.mrb[0].mxu0
    %v752 = vadd.f32 %v670, %v751
    %753 = vdwg.mxu0
    %v754 = vadd.f32 %v750, %v659
    %v755 = vadd.f32 %v752, %v660
    %v758 = vcombine.low %v754, %v755
    %s760 = smul.u32 %s645, 2
    %s761 = smul.addr %s760, 4
    %s762 = scalar_lea.vmem %s4, %s761
    %763 = vst [vmem:[%s762] sm:$0x77] %v758
  $region22: #{tpu_custom_call.1} parent=0 // loop_footer
    %s649 = sadd.s32 1, %s645
  $region23: #{tpu_custom_call.1} parent=0 // loop_footer_branch
    %644 = sbr.rel target = $region19
  $region24: #{tpu_custom_call.1} parent=0 // loop_exit
    _
  // Predicated region
  $region25: #{tpu_custom_call.1} parent=0 // pred_check
    _
  $region26: #{tpu_custom_call.1} parent=0 // pred_check_branch
    %765 = sbr.rel (0) target = $region28
  $region27: #{tpu_custom_call.1} parent=0 // pred_region
    _
  $region28: #{tpu_custom_call.1} parent=0 // pred_fallthru
    _
  // Predicated region
  $region29: #{tpu_custom_call.1} parent=0 // pred_check
    _
  $region30: #{tpu_custom_call.1} parent=0 // pred_check_branch
    %767 = sbr.rel (0) target = $region32
  $region31: #{tpu_custom_call.1} parent=0 // pred_region
    _
  $region32: #{tpu_custom_call.1} parent=0 // pred_fallthru
    _

</llo_original>
